<compile_context>
chip_gen: v7x
topology: tpu7x:2x2x1
jax: 0.10.0
libtpu: 0.0.40
codegen_flags: <defaults>
</compile_context>

<pallas_src>
import math

import jax
import jax.numpy as jnp
from jax.experimental import pallas as pl
from jax.experimental.pallas import tpu as pltpu

_LANE = 128


def _mc_objective_kernel(x_ref, w_ref, o_ref):
    # x_ref: (block_rows, o*128) lane-dense repacked samples
    # w_ref: (o*128, 128) block-diagonal weights (constant index_map -> resident)
    # o_ref: (block_rows, 128) lane-dense objective values
    # TODO(synk): on v5e with f32 samples the 128x-inflated MXU matmul can rival
    # HBM time; if bundle profiling shows MXU-bound there, swap for a VPU
    # multiply + strided lane reduction (or bf16 LHS cast) on that chip only.
    o_ref[...] = jnp.dot(
        x_ref[...], w_ref[...], preferred_element_type=jnp.float32
    ).astype(o_ref.dtype)


def _einsum_objective(samples: jax.Array, weights: jax.Array) -> jax.Array:
    out = jnp.einsum(
        "...o,o->...", samples.astype(jnp.float32), weights.astype(jnp.float32))
    return out.astype(samples.dtype)


def mc_acquisition_objective(samples: jax.Array, weights: jax.Array,
                             *, block_rows: int | None = None,
                             use_pallas: bool | None = None) -> jax.Array:
    """Evaluate the MC objective on posterior samples.

    Args:
        samples: `sample_shape x batch_shape x q x o` array.
        weights: `(o,)` array of outcome weights.

    Returns:
        `sample_shape x batch_shape x q` array of objective values.
    """
    *lead, o = samples.shape
    n = math.prod(lead) if lead else 1

    if use_pallas is None:
        # Small problems: XLA's fused einsum is strictly faster than any
        # pallas_call launch + pipeline prologue.
        # TODO(synk): crossover is chip-dependent (higher on v7x); could
        # recalibrate via pltpu.get_tpu_info() / ChipVersion.
        use_pallas = n * o >= (1 << 18)

    # Only complete lane-rows (groups of 128 flattened sample rows) go through
    # Pallas; the <128-row ragged tail uses the fused einsum so we never
    # materialize a padded full-size copy of the input in HBM.
    n_main = (n // _LANE) * _LANE
    if not use_pallas or n_main == 0:
        return _einsum_objective(samples, weights)

    dtype = samples.dtype
    itemsize = jnp.dtype(dtype).itemsize
    lane_cols = o * _LANE
    n_rows = n_main // _LANE

    x_flat = samples.reshape(-1)
    # Contiguous prefix slice + reshape: a free bitcast when n % 128 == 0
    # (common case); at worst a prefix copy, never a full padded rewrite.
    x2 = x_flat[: n_main * o].reshape(n_rows, lane_cols)

    # Static block-diagonal weights: W[k*o + j, k] = w[j], in samples.dtype so
    # the MXU consumes bf16/f32 natively; accumulation is f32 in-kernel.
    # NOTE: for bf16 samples this path is marginally less precise than the
    # f32 einsum fallback (documented precision difference).
    w_blk = jnp.kron(
        jnp.eye(_LANE, dtype=dtype),
        weights.reshape(o, 1).astype(dtype),
    )

    # Dtype-aware sublane granularity (native packing: 8 f32 / 16 bf16 / 32 i8).
    sub = {4: 8, 2: 16, 1: 32}.get(itemsize, 8)

    if block_rows is None:
        # ~8 MiB of input per block: double-buffered input (16 MiB) + output
        # (~4 MiB) + resident W stays under the 48 MiB scoped-VMEM limit set
        # below (v7x: 64 MiB physical/TC; v5e/v6e: 128 MiB physical).
        target_bytes = 8 << 20
        bytes_per_row = lane_cols * itemsize
        block_rows = max(sub, (target_bytes // bytes_per_row) // sub * sub)
        # Guarantee >=4 grid steps when possible so v7x's two TensorCores both
        # get work ("parallel" axis) and the DMA/compute pipeline can overlap.
        if pl.cdiv(n_rows, block_rows) < 4 and n_rows > sub:
            quarter = pl.cdiv(n_rows, 4)
            block_rows = ((quarter + sub - 1) // sub) * sub
    block_rows = min(block_rows, n_rows)

    grid = (pl.cdiv(n_rows, block_rows),)

    # Advisory cost: bytes = input tile stream + output + weights; flops
    # reflect the (inflated) block-diagonal matmul actually executed.
    cost = pl.CostEstimate(
        flops=2 * n_rows * lane_cols * _LANE,
        transcendentals=0,
        bytes_accessed=(n_rows * lane_cols + n_rows * _LANE
                        + lane_cols * _LANE) * itemsize,
    )

    out = pl.pallas_call(
        _mc_objective_kernel,
        out_shape=jax.ShapeDtypeStruct((n_rows, _LANE), dtype),
        grid=grid,
        in_specs=[
            pl.BlockSpec((block_rows, lane_cols), lambda i: (i, 0)),
            pl.BlockSpec((lane_cols, _LANE), lambda i: (0, 0)),
        ],
        out_specs=pl.BlockSpec((block_rows, _LANE), lambda i: (i, 0)),
        compiler_params=pltpu.CompilerParams(
            dimension_semantics=("parallel",),
            vmem_limit_bytes=48 << 20,
        ),
        cost_estimate=cost,
    )(x2, w_blk)

    # out[r, k] corresponds to flattened sample row r*128 + k.
    main = out.reshape(-1)
    if n_main == n:
        return main.reshape(*lead)
    tail = _einsum_objective(
        x_flat[n_main * o:].reshape(n - n_main, o), weights)
    return jnp.concatenate([main, tail]).reshape(*lead)


if __name__ == "__main__":
    key = jax.random.PRNGKey(0)
    fn = jax.jit(mc_acquisition_objective,
                 static_argnames=("block_rows", "use_pallas"))

    # ---- Check 1: lane-aligned case (N = 256 = 2 * 128). -------------------
    sample_shape, batch, q, o = 16, 2, 8, 4
    samples = jax.random.normal(key, (sample_shape, batch, q, o),
                                dtype=jnp.float32)
    ramp = jnp.arange(1, o + 1, dtype=jnp.float32)
    weights = ramp / jnp.sum(ramp)

    result = jax.block_until_ready(fn(samples, weights, use_pallas=True))
    ref = jnp.sum(samples * weights.reshape(1, 1, 1, o), axis=-1)
    assert result.shape == (sample_shape, batch, q), result.shape
    assert jnp.allclose(result, ref, atol=1e-5, rtol=1e-5)

    # Size-gated auto-dispatch (pure-JAX path for tiny N).
    small = jax.block_until_ready(fn(samples, weights))
    assert jnp.allclose(small, ref, atol=1e-5, rtol=1e-5)

    # ---- Check 2: ragged N (tail path) + multi-step parallel grid. ---------
    sample_shape2, batch2, q2 = 33, 5, 7        # N = 1155 -> 9 lane-rows + 3 tail
    samples2 = jax.random.normal(jax.random.PRNGKey(1),
                                 (sample_shape2, batch2, q2, o),
                                 dtype=jnp.float32)
    result2 = jax.block_until_ready(fn(samples2, weights, use_pallas=True))
    ref2 = jnp.sum(samples2 * weights.reshape(1, 1, 1, o), axis=-1)
    assert result2.shape == (sample_shape2, batch2, q2), result2.shape
    assert jnp.allclose(result2, ref2, atol=1e-5, rtol=1e-5)

    print("KERNEL_OK")
</pallas_src>

<mosaic_0001>
module attributes {stable_mosaic.version = 11 : i64} {
  func.func @_mc_objective_kernel(%arg0: i32, %arg1: memref<2x512xf32, #tpu.memory_space<vmem>>, %arg2: memref<512x128xf32, #tpu.memory_space<vmem>>, %arg3: memref<2x128xf32, #tpu.memory_space<vmem>>) attributes {dimension_semantics = [#tpu.dimension_semantics<parallel>], iteration_bounds = array<i64: 1>, scalar_prefetch = 0 : i64, scratch_operands = 0 : i64, tpu.core_type = #tpu.core_type<tc>, window_params = [{transform_indices = @transform_0, window_bounds = array<i64: 2, 512>}, {pipeline_mode = #tpu.pipeline_mode<synchronous>, transform_indices = @transform_1, window_bounds = array<i64: 512, 128>}, {transform_indices = @transform_2, window_bounds = array<i64: 2, 128>}]} {
    %c0 = arith.constant 0 : index
    %c0_0 = arith.constant 0 : index
    %0 = vector.load %arg1[%c0, %c0_0] : memref<2x512xf32, #tpu.memory_space<vmem>>, vector<2x512xf32>
    %c0_1 = arith.constant 0 : index
    %c0_2 = arith.constant 0 : index
    %1 = vector.load %arg2[%c0_1, %c0_2] : memref<512x128xf32, #tpu.memory_space<vmem>>, vector<512x128xf32>
    %cst = arith.constant dense<0.000000e+00> : vector<2x128xf32>
    %2 = tpu.matmul %0, %1, %cst {dimension_numbers = #tpu.dot_dimension_numbers<[1], [0], [0], [1], [0, 0, 1, 1], [], []>} : vector<2x512xf32>, vector<512x128xf32>, vector<2x128xf32> -> vector<2x128xf32>
    %c0_3 = arith.constant 0 : index
    %c0_4 = arith.constant 0 : index
    %3 = vector.load %arg3[%c0_3, %c0_4] : memref<2x128xf32, #tpu.memory_space<vmem>>, vector<2x128xf32>
    tpu.vector_store %arg3[%c0_3, %c0_4], %2 {strides = array<i32>} : memref<2x128xf32, #tpu.memory_space<vmem>>, vector<2x128xf32>,
    return
  }
  func.func @transform_0(%arg0: i32) -> (i32, i32) {
    %c0_i32 = arith.constant 0 : i32
    %c0_i32_0 = arith.constant 0 : i32
    return %arg0, %c0_i32 : i32, i32
  }
  func.func @transform_1(%arg0: i32) -> (i32, i32) {
    %c0_i32 = arith.constant 0 : i32
    %c0_i32_0 = arith.constant 0 : i32
    %c0_i32_1 = arith.constant 0 : i32
    return %c0_i32, %c0_i32_0 : i32, i32
  }
  func.func @transform_2(%arg0: i32) -> (i32, i32) {
    %c0_i32 = arith.constant 0 : i32
    %c0_i32_0 = arith.constant 0 : i32
    return %arg0, %c0_i32 : i32, i32
  }
}

</mosaic_0001>

<llo_original>
// kernel: mc_acquisition_objective.1
$region0: #{mc_acquisition_objective.1}
  #allocation0 [shape = 'u32[]', space=smem, size = 0x4, offset = 0x4, fixed_abs, tag = 'smem constant byte address 0x4 - core index']
  #allocation1 [shape = 'u32[144,128]{1,0:T(1,128)}', space=vmem, size = 0x12000, scoped, tag = 'internal scratch']
  %s0 = inlined_call_operand.vmem [shape: f32[2,512], index: 0, kind: input, shape index: {}]
  %s1 = inlined_call_operand.vmem [shape: f32[512,128], index: 1, kind: input, shape index: {}]
  %s2 = inlined_call_operand.vmem [shape: f32[2,128], index: 2, kind: output, shape index: {}]
  %s3 = sld [smem:[#allocation0]]
  $region18: #{mc_acquisition_objective.1} parent=0
    _
  %s5 = ssub.s32 1, %s3
  %s6 = scalar_select 0, %s5, %s3
  // Predicated region
  $region2: #{mc_acquisition_objective.1} parent=0 // pred_check
    _
  $region3: #{mc_acquisition_objective.1} parent=0 // pred_check_branch
    %8 = sbr.rel (0) target = $region5
  $region4: #{mc_acquisition_objective.1} parent=0 // pred_region
    _
  $region5: #{mc_acquisition_objective.1} parent=0 // pred_fallthru
    _
  // Predicated region
  $region6: #{mc_acquisition_objective.1} parent=0 // pred_check
    _
  $region7: #{mc_acquisition_objective.1} parent=0 // pred_check_branch
    %10 = sbr.rel (0) target = $region9
  $region8: #{mc_acquisition_objective.1} parent=0 // pred_region
    _
  $region9: #{mc_acquisition_objective.1} parent=0 // pred_fallthru
    _
  %v11 = vld [vmem:[%s0] sm:$0xff]
  %v12 = vld [vmem:[%s1] sm:$0xff]
  %v13 = vld [vmem:[%s1 + $0x8] sm:$0xff]
  %v14 = vld [vmem:[%s1 + $0x10] sm:$0xff]
  %v15 = vld [vmem:[%s1 + $0x18] sm:$0xff]
  %v16 = vld [vmem:[%s1 + $0x20] sm:$0xff]
  %v17 = vld [vmem:[%s1 + $0x28] sm:$0xff]
  %v18 = vld [vmem:[%s1 + $0x30] sm:$0xff]
  %v19 = vld [vmem:[%s1 + $0x38] sm:$0xff]
  %v20 = vld [vmem:[%s1 + $0x40] sm:$0xff]
  %v21 = vld [vmem:[%s1 + $0x48] sm:$0xff]
  %v22 = vld [vmem:[%s1 + $0x50] sm:$0xff]
  %v23 = vld [vmem:[%s1 + $0x58] sm:$0xff]
  %v24 = vld [vmem:[%s1 + $0x60] sm:$0xff]
  %v25 = vld [vmem:[%s1 + $0x68] sm:$0xff]
  %v26 = vld [vmem:[%s1 + $0x70] sm:$0xff]
  %v27 = vld [vmem:[%s1 + $0x78] sm:$0xff]
  %v28 = vld [vmem:[%s1 + $0x80] sm:$0xff]
  %v29 = vld [vmem:[%s1 + $0x88] sm:$0xff]
  %v30 = vld [vmem:[%s1 + $0x90] sm:$0xff]
  %v31 = vld [vmem:[%s1 + $0x98] sm:$0xff]
  %v32 = vld [vmem:[%s1 + $0xa0] sm:$0xff]
  %v33 = vld [vmem:[%s1 + $0xa8] sm:$0xff]
  %v34 = vld [vmem:[%s1 + $0xb0] sm:$0xff]
  %v35 = vld [vmem:[%s1 + $0xb8] sm:$0xff]
  %v36 = vld [vmem:[%s1 + $0xc0] sm:$0xff]
  %v37 = vld [vmem:[%s1 + $0xc8] sm:$0xff]
  %v38 = vld [vmem:[%s1 + $0xd0] sm:$0xff]
  %v39 = vld [vmem:[%s1 + $0xd8] sm:$0xff]
  %v40 = vld [vmem:[%s1 + $0xe0] sm:$0xff]
  %v41 = vld [vmem:[%s1 + $0xe8] sm:$0xff]
  %v42 = vld [vmem:[%s1 + $0xf0] sm:$0xff]
  %v43 = vld [vmem:[%s1 + $0xf8] sm:$0xff]
  %v44 = vld [vmem:[%s1 + $0x100] sm:$0xff]
  %v45 = vld [vmem:[%s1 + $0x108] sm:$0xff]
  %v46 = vld [vmem:[%s1 + $0x110] sm:$0xff]
  %v47 = vld [vmem:[%s1 + $0x118] sm:$0xff]
  %v48 = vld [vmem:[%s1 + $0x120] sm:$0xff]
  %v49 = vld [vmem:[%s1 + $0x128] sm:$0xff]
  %v50 = vld [vmem:[%s1 + $0x130] sm:$0xff]
  %v51 = vld [vmem:[%s1 + $0x138] sm:$0xff]
  %v52 = vld [vmem:[%s1 + $0x140] sm:$0xff]
  %v53 = vld [vmem:[%s1 + $0x148] sm:$0xff]
  %v54 = vld [vmem:[%s1 + $0x150] sm:$0xff]
  %v55 = vld [vmem:[%s1 + $0x158] sm:$0xff]
  %v56 = vld [vmem:[%s1 + $0x160] sm:$0xff]
  %v57 = vld [vmem:[%s1 + $0x168] sm:$0xff]
  %v58 = vld [vmem:[%s1 + $0x170] sm:$0xff]
  %v59 = vld [vmem:[%s1 + $0x178] sm:$0xff]
  %v60 = vld [vmem:[%s1 + $0x180] sm:$0xff]
  %v61 = vld [vmem:[%s1 + $0x188] sm:$0xff]
  %v62 = vld [vmem:[%s1 + $0x190] sm:$0xff]
  %v63 = vld [vmem:[%s1 + $0x198] sm:$0xff]
  %v64 = vld [vmem:[%s1 + $0x1a0] sm:$0xff]
  %v65 = vld [vmem:[%s1 + $0x1a8] sm:$0xff]
  %v66 = vld [vmem:[%s1 + $0x1b0] sm:$0xff]
  %v67 = vld [vmem:[%s1 + $0x1b8] sm:$0xff]
  %v68 = vld [vmem:[%s1 + $0x1c0] sm:$0xff]
  %v69 = vld [vmem:[%s1 + $0x1c8] sm:$0xff]
  %v70 = vld [vmem:[%s1 + $0x1d0] sm:$0xff]
  %v71 = vld [vmem:[%s1 + $0x1d8] sm:$0xff]
  %v72 = vld [vmem:[%s1 + $0x1e0] sm:$0xff]
  %v73 = vld [vmem:[%s1 + $0x1e8] sm:$0xff]
  %v74 = vld [vmem:[%s1 + $0x1f0] sm:$0xff]
  %v75 = vld [vmem:[%s1 + $0x1f8] sm:$0xff]
  %v77 = vcombine.high %v11, %v11
  %v79 = vunpack.c.l.s4 1983009808
  %v80 = vunpack.c.0.s8 %v79
  %v81 = vlaneseq
  %v82 = vshrl.u32 %v81, 7
  %v83 = vsub.s32 %v80, %v82
  %v84 = vrot.slane %v11, %v83
  %v86 = vunpack.c.l.s4 1983009808
  %v87 = vunpack.c.0.s8 %v86
  %v88 = vlaneseq
  %v89 = vshrl.u32 %v88, 7
  %v90 = vsub.s32 %v87, %v89
  %v91 = vrot.slane %v77, %v90
  %v92 = vcombine.high %v84, %v84
  %v93 = vcombine.high %v91, %v91
  %98 = vmatprep.subr.mxu0 0.0
  %99 = vmatpush1.msra.mxu0 %v12
  %100 = vmatprep.subr.mxu0 0.0
  %101 = vmatpush1.msra.mxu0 %v13
  %102 = vmatprep.subr.mxu0 0.0
  %103 = vmatpush1.msra.mxu0 %v14
  %104 = vmatprep.subr.mxu0 0.0
  %105 = vmatpush1.msra.mxu0 %v15
  %106 = vmatprep.subr.mxu0 0.0
  %107 = vmatpush1.msra.mxu0 %v16
  %108 = vmatprep.subr.mxu0 0.0
  %109 = vmatpush1.msra.mxu0 %v17
  %110 = vmatprep.subr.mxu0 0.0
  %111 = vmatpush1.msra.mxu0 %v18
  %112 = vmatprep.subr.mxu0 0.0
  %113 = vmatpush1.msra.mxu0 %v19
  %114 = vmatprep.subr.mxu0 0.0
  %115 = vmatpush1.msra.mxu0 %v20
  %116 = vmatprep.subr.mxu0 0.0
  %117 = vmatpush1.msra.mxu0 %v21
  %118 = vmatprep.subr.mxu0 0.0
  %119 = vmatpush1.msra.mxu0 %v22
  %120 = vmatprep.subr.mxu0 0.0
  %121 = vmatpush1.msra.mxu0 %v23
  %122 = vmatprep.subr.mxu0 0.0
  %123 = vmatpush1.msra.mxu0 %v24
  %124 = vmatprep.subr.mxu0 0.0
  %125 = vmatpush1.msra.mxu0 %v25
  %126 = vmatprep.subr.mxu0 0.0
  %127 = vmatpush1.msra.mxu0 %v26
  %128 = vmatprep.subr.mxu0 0.0
  %129 = vmatpush1.msra.mxu0 %v27
  %130 = vmatprep.subr.mxu0 0.0
  %131 = vmatpush1.msra.mxu0 %v28
  %132 = vmatprep.subr.mxu0 0.0
  %133 = vmatpush1.msra.mxu0 %v29
  %134 = vmatprep.subr.mxu0 0.0
  %135 = vmatpush1.msra.mxu0 %v30
  %136 = vmatprep.subr.mxu0 0.0
  %137 = vmatpush1.msra.mxu0 %v31
  %138 = vmatprep.subr.mxu0 0.0
  %139 = vmatpush1.msra.mxu0 %v32
  %140 = vmatprep.subr.mxu0 0.0
  %141 = vmatpush1.msra.mxu0 %v33
  %142 = vmatprep.subr.mxu0 0.0
  %143 = vmatpush1.msra.mxu0 %v34
  %144 = vmatprep.subr.mxu0 0.0
  %145 = vmatpush1.msra.mxu0 %v35
  %146 = vmatprep.subr.mxu0 0.0
  %147 = vmatpush1.msra.mxu0 %v36
  %148 = vmatprep.subr.mxu0 0.0
  %149 = vmatpush1.msra.mxu0 %v37
  %150 = vmatprep.subr.mxu0 0.0
  %151 = vmatpush1.msra.mxu0 %v38
  %152 = vmatprep.subr.mxu0 0.0
  %153 = vmatpush1.msra.mxu0 %v39
  %154 = vmatprep.subr.mxu0 0.0
  %155 = vmatpush1.msra.mxu0 %v40
  %156 = vmatprep.subr.mxu0 0.0
  %157 = vmatpush1.msra.mxu0 %v41
  %158 = vmatprep.subr.mxu0 0.0
  %159 = vmatpush1.msra.mxu0 %v42
  %160 = vmatprep.subr.mxu0 0.0
  %161 = vmatpush1.msra.mxu0 %v43
  %162 = vmatprep.mubr.f32.mxu0 %v92
  %163 = vmatmul.mubr.f32.gmra.mrb[0].mxu0 %v84
  %v164 = vpop.f32.mrb[0].mxu0
  %v165 = vadd.f32 0.0, %v164
  %v166 = vpop.f32.mrb[0].mxu0
  %167 = vdwg.mxu0
  %168 = vmatprep.subr.mxu0 0.0
  %169 = vmatpush1.msra.mxu0 %v44
  %170 = vmatprep.subr.mxu0 0.0
  %171 = vmatpush1.msra.mxu0 %v45
  %172 = vmatprep.subr.mxu0 0.0
  %173 = vmatpush1.msra.mxu0 %v46
  %174 = vmatprep.subr.mxu0 0.0
  %175 = vmatpush1.msra.mxu0 %v47
  %176 = vmatprep.subr.mxu0 0.0
  %177 = vmatpush1.msra.mxu0 %v48
  %178 = vmatprep.subr.mxu0 0.0
  %179 = vmatpush1.msra.mxu0 %v49
  %180 = vmatprep.subr.mxu0 0.0
  %181 = vmatpush1.msra.mxu0 %v50
  %182 = vmatprep.subr.mxu0 0.0
  %183 = vmatpush1.msra.mxu0 %v51
  %184 = vmatprep.subr.mxu0 0.0
  %185 = vmatpush1.msra.mxu0 %v52
  %186 = vmatprep.subr.mxu0 0.0
  %187 = vmatpush1.msra.mxu0 %v53
  %188 = vmatprep.subr.mxu0 0.0
  %189 = vmatpush1.msra.mxu0 %v54
  %190 = vmatprep.subr.mxu0 0.0
  %191 = vmatpush1.msra.mxu0 %v55
  %192 = vmatprep.subr.mxu0 0.0
  %193 = vmatpush1.msra.mxu0 %v56
  %194 = vmatprep.subr.mxu0 0.0
  %195 = vmatpush1.msra.mxu0 %v57
  %196 = vmatprep.subr.mxu0 0.0
  %197 = vmatpush1.msra.mxu0 %v58
  %198 = vmatprep.subr.mxu0 0.0
  %199 = vmatpush1.msra.mxu0 %v59
  %200 = vmatprep.subr.mxu0 0.0
  %201 = vmatpush1.msra.mxu0 %v60
  %202 = vmatprep.subr.mxu0 0.0
  %203 = vmatpush1.msra.mxu0 %v61
  %204 = vmatprep.subr.mxu0 0.0
  %205 = vmatpush1.msra.mxu0 %v62
  %206 = vmatprep.subr.mxu0 0.0
  %207 = vmatpush1.msra.mxu0 %v63
  %208 = vmatprep.subr.mxu0 0.0
  %209 = vmatpush1.msra.mxu0 %v64
  %210 = vmatprep.subr.mxu0 0.0
  %211 = vmatpush1.msra.mxu0 %v65
  %212 = vmatprep.subr.mxu0 0.0
  %213 = vmatpush1.msra.mxu0 %v66
  %214 = vmatprep.subr.mxu0 0.0
  %215 = vmatpush1.msra.mxu0 %v67
  %216 = vmatprep.subr.mxu0 0.0
  %217 = vmatpush1.msra.mxu0 %v68
  %218 = vmatprep.subr.mxu0 0.0
  %219 = vmatpush1.msra.mxu0 %v69
  %220 = vmatprep.subr.mxu0 0.0
  %221 = vmatpush1.msra.mxu0 %v70
  %222 = vmatprep.subr.mxu0 0.0
  %223 = vmatpush1.msra.mxu0 %v71
  %224 = vmatprep.subr.mxu0 0.0
  %225 = vmatpush1.msra.mxu0 %v72
  %226 = vmatprep.subr.mxu0 0.0
  %227 = vmatpush1.msra.mxu0 %v73
  %228 = vmatprep.subr.mxu0 0.0
  %229 = vmatpush1.msra.mxu0 %v74
  %230 = vmatprep.subr.mxu0 0.0
  %231 = vmatpush1.msra.mxu0 %v75
  %232 = vmatprep.mubr.f32.mxu0 %v93
  %233 = vmatmul.mubr.f32.gmra.mrb[0].mxu0 %v91
  %v234 = vpop.f32.mrb[0].mxu0
  %v235 = vadd.f32 %v165, %v234
  %v236 = vpop.f32.mrb[0].mxu0
  %237 = vdwg.mxu0
  %238 = vst [vmem:[%s2] sm:$0x3] %v235
  // Predicated region
  $region10: #{mc_acquisition_objective.1} parent=0 // pred_check
    _
  $region11: #{mc_acquisition_objective.1} parent=0 // pred_check_branch
    %240 = sbr.rel (0) target = $region13
  $region12: #{mc_acquisition_objective.1} parent=0 // pred_region
    _
  $region13: #{mc_acquisition_objective.1} parent=0 // pred_fallthru
    _
  // Predicated region
  $region14: #{mc_acquisition_objective.1} parent=0 // pred_check
    _
  $region15: #{mc_acquisition_objective.1} parent=0 // pred_check_branch
    %242 = sbr.rel (0) target = $region17
  $region16: #{mc_acquisition_objective.1} parent=0 // pred_region
    _
  $region17: #{mc_acquisition_objective.1} parent=0 // pred_fallthru
    _

</llo_original>
